<compile_context>
chip_gen: v5e
topology: v5e:2x2
jax: 0.10.0
libtpu: 0.0.40
codegen_flags: <defaults>
</compile_context>

<pallas_src>
import functools

import jax
import jax.numpy as jnp
from jax.experimental import pallas as pl
from jax.experimental.pallas import tpu as pltpu


INPUT_DIM = 15
HIDDEN_DIM = 64
OUTPUT_DIM = 1
NUM_LAYERS = 5
BN_EPS = 1e-5


def _round_up(x, m):
    return ((x + m - 1) // m) * m


def _vmem_spec():
    # Full-array resident-in-VMEM spec (block index never changes -> one DMA).
    return pl.BlockSpec(memory_space=pltpu.MemorySpace.VMEM)


# ----------------------------------------------------------------------------
# Fused Pallas kernel: 5x (SAGE + BN + ReLU) + global_mean_pool + Linear
# Layout: everything node-major along lanes, i.e. activations are (H, N).
# ----------------------------------------------------------------------------
def _fused_gcn_kernel(xT_ref, at_ref, wlT_ref, wrT_ref, bT_ref, gammaT_ref,
                      betaT_ref, pT_ref, lw_ref, lb_ref, out_ref, xnorm_scr,
                      *, n_real):
    l = pl.program_id(0)                      # layer index (sequential)
    n_pad = xT_ref.shape[1]
    inv_n = 1.0 / n_real

    # ---- layer 0: load the (already transposed/padded) input features.
    @pl.when(l == 0)
    def _():
        xnorm_scr[...] = xT_ref[...]

    xT = xnorm_scr[...]                       # (H, Np) bf16

    # ---- SAGEConv.  Mean aggregation over neighbours incl. self-loop:
    #      aggr = A @ x    ->   aggrT = xT @ A^T      (output lanes = Np)
    aggrT = jnp.dot(xT, at_ref[...],
                    preferred_element_type=jnp.float32)          # (H, Np) f32
    #      h = aggr @ Wl + x @ Wr + b   ->   hT = Wl^T@aggrT + Wr^T@xT + b
    hT = (jnp.dot(wlT_ref[l], aggrT.astype(jnp.bfloat16),
                  preferred_element_type=jnp.float32)
          + jnp.dot(wrT_ref[l], xT, preferred_element_type=jnp.float32)
          + bT_ref[l])                                           # (H, Np) f32

    # ---- BatchNorm1d (training-mode batch stats, biased variance) + ReLU.
    #      Masked to the real nodes; centered two-pass variance (no
    #      E[x^2]-E[x]^2 cancellation).  Stats are lane reductions.
    cols = jax.lax.broadcasted_iota(jnp.int32, (1, n_pad), 1)
    mask = (cols < n_real).astype(jnp.float32)                   # (1, Np)
    mean = jnp.sum(hT * mask, axis=1, keepdims=True) * inv_n     # (H, 1)
    cent = (hT - mean) * mask
    var = jnp.sum(cent * cent, axis=1, keepdims=True) * inv_n    # (H, 1)
    scale = jax.lax.rsqrt(var + BN_EPS) * gammaT_ref[l]
    xn = jnp.maximum(cent * scale + betaT_ref[l], 0.0) * mask    # (H, Np) f32

    # ---- feed the next layer, or run the pooling/Linear epilogue.
    @pl.when(l < NUM_LAYERS - 1)
    def _():
        xnorm_scr[...] = xn.astype(jnp.bfloat16)

    @pl.when(l == NUM_LAYERS - 1)
    def _epilogue():
        # global_mean_pool (reassociated):  pooledT = xfinT @ P^T   (H, G)
        pooledT = jnp.dot(xn, pT_ref[...],
                          preferred_element_type=jnp.float32)
        # final Linear (output_dim = 1): VPU broadcast-mul + sublane reduce
        # instead of an MXU dot with 1 output lane.
        out_ref[...] = (jnp.sum(pooledT * lw_ref[...], axis=0, keepdims=True)
                        + lb_ref[...])                           # (1, G)


def _make_fused_call(n_real, n_pad, num_graphs):
    kernel = functools.partial(_fused_gcn_kernel, n_real=n_real)

    # VMEM budget: resident A^T + activations + per-layer f32 temporaries.
    need = (n_pad * n_pad * 2                                   # A^T (bf16)
            + 2 * HIDDEN_DIM * n_pad * 2                        # xT in + scratch
            + 6 * HIDDEN_DIM * n_pad * 4                        # aggr/h/cent/xn...
            + n_pad * num_graphs * 4                            # pool matrix
            + NUM_LAYERS * (2 * HIDDEN_DIM * HIDDEN_DIM * 2     # Wl/Wr (bf16)
                            + 3 * HIDDEN_DIM * 4)               # b/gamma/beta
            + (2 << 20))                                        # misc slack

    # Cap by the *actual* hardware VMEM (64 MiB on v7x, 128 MiB on v5e/v6e).
    try:
        cap = getattr(pltpu.get_tpu_info(), "vmem_capacity_bytes", 64 << 20)
    except Exception:  # pragma: no cover - conservative fallback
        cap = 64 << 20
    hw_limit = cap - (6 << 20)                # headroom for compiler scratch
    if need > hw_limit:
        raise ValueError(
            f"Graph too large for the resident-adjacency Pallas kernel: "
            f"needs ~{need >> 20} MiB VMEM, hardware allows ~{hw_limit >> 20} "
            f"MiB. TODO(synk): streamed / block-sparse adjacency fallback.")
    vmem_limit = int(max(32 << 20, min(hw_limit, int(need * 1.25))))

    return pl.pallas_call(
        kernel,
        out_shape=jax.ShapeDtypeStruct((1, num_graphs), jnp.float32),
        grid_spec=pltpu.PrefetchScalarGridSpec(
            num_scalar_prefetch=0,
            grid=(NUM_LAYERS,),               # layers are strictly sequential
            in_specs=[_vmem_spec()] * 10,
            out_specs=_vmem_spec(),
            scratch_shapes=[
                pltpu.VMEM((HIDDEN_DIM, n_pad), jnp.bfloat16),  # layer act.
            ]),
        compiler_params=pltpu.CompilerParams(
            dimension_semantics=("arbitrary",),
            vmem_limit_bytes=vmem_limit),
    )


# ----------------------------------------------------------------------------
# Glue (plain JAX): graph preprocessing + parameter construction
# ----------------------------------------------------------------------------
def build_norm_adj(edge_index, num_nodes):
    """Dense adjacency with self-loops, row-normalized (mean aggregation)."""
    src, dst = edge_index[0], edge_index[1]
    loops = jnp.arange(num_nodes, dtype=src.dtype)       # add_self_loops
    src = jnp.concatenate([src, loops])
    dst = jnp.concatenate([dst, loops])
    adj = jnp.zeros((num_nodes, num_nodes), jnp.float32)
    adj = adj.at[dst, src].add(1.0)                      # message j -> i
    deg = jnp.sum(adj, axis=1, keepdims=True)
    return adj / jnp.maximum(deg, 1.0)


def build_pool_matrix(batch, num_graphs, num_nodes):
    """P[g, n] = 1/|graph g| if node n is in graph g (global_mean_pool)."""
    onehot = (batch[None, :] == jnp.arange(num_graphs)[:, None]).astype(
        jnp.float32)                                     # (G, N)
    counts = jnp.sum(onehot, axis=1, keepdims=True)
    return onehot / jnp.maximum(counts, 1.0)


def init_params(key):
    dims = [INPUT_DIM] + [HIDDEN_DIM] * NUM_LAYERS
    wlT, wrT, bT, gammaT, betaT = [], [], [], [], []
    for li in range(NUM_LAYERS):
        f_in, f_out = dims[li], dims[li + 1]
        key, k1, k2, k3 = jax.random.split(key, 4)
        s = 1.0 / jnp.sqrt(jnp.float32(f_in))
        wl = jax.random.uniform(k1, (f_in, f_out), jnp.float32, -s, s)
        wr = jax.random.uniform(k2, (f_in, f_out), jnp.float32, -s, s)
        b = jax.random.uniform(k3, (f_out,), jnp.float32, -s, s)
        # Zero-pad the input dim (15 -> 64) so every layer shares one weight
        # shape; padded input features are zero so the result is unchanged.
        wl_p = jnp.zeros((HIDDEN_DIM, f_out), jnp.float32).at[:f_in].set(wl)
        wr_p = jnp.zeros((HIDDEN_DIM, f_out), jnp.float32).at[:f_in].set(wr)
        wlT.append(wl_p.T)                               # (H_out, H_in)
        wrT.append(wr_p.T)
        bT.append(b[:, None])                            # (H, 1)
        gammaT.append(jnp.ones((HIDDEN_DIM, 1), jnp.float32))
        betaT.append(jnp.zeros((HIDDEN_DIM, 1), jnp.float32))
    key, k1, k2 = jax.random.split(key, 3)
    s = 1.0 / jnp.sqrt(jnp.float32(HIDDEN_DIM))
    lin_w = jax.random.uniform(k1, (HIDDEN_DIM, OUTPUT_DIM), jnp.float32, -s, s)
    lin_b = jax.random.uniform(k2, (1, OUTPUT_DIM), jnp.float32, -s, s)
    return dict(
        wlT=jnp.stack(wlT).astype(jnp.bfloat16),         # (L, H, H) bf16
        wrT=jnp.stack(wrT).astype(jnp.bfloat16),         # (L, H, H) bf16
        bT=jnp.stack(bT),                                # (L, H, 1) f32
        gammaT=jnp.stack(gammaT),                        # (L, H, 1) f32
        betaT=jnp.stack(betaT),                          # (L, H, 1) f32
        lin_w=lin_w,                                     # (H, 1)    f32
        lin_b=lin_b)                                     # (1, 1)    f32


@functools.partial(jax.jit, static_argnames=("num_graphs",))
def advanced_gcn_forward(params, x, edge_index, batch, num_graphs):
    n = x.shape[0]
    n_pad = max(128, _round_up(n, 128))                  # node dim -> lanes

    a = build_norm_adj(edge_index, n)                    # (n, n) f32
    at_pad = jnp.zeros((n_pad, n_pad), jnp.float32).at[:n, :n].set(a.T)
    xT_pad = jnp.zeros((HIDDEN_DIM, n_pad), jnp.float32).at[
        :INPUT_DIM, :n].set(x.T)
    p = build_pool_matrix(batch, num_graphs, n)          # (G, n)
    pT_pad = jnp.zeros((n_pad, num_graphs), jnp.float32).at[:n, :].set(p.T)

    call = _make_fused_call(n, n_pad, num_graphs)
    outT = call(xT_pad.astype(jnp.bfloat16),             # (H, Np)  bf16
                at_pad.astype(jnp.bfloat16),             # (Np, Np) bf16
                params["wlT"], params["wrT"], params["bT"],
                params["gammaT"], params["betaT"],
                pT_pad, params["lin_w"], params["lin_b"])
    return outT.reshape(num_graphs, OUTPUT_DIM)


# ----------------------------------------------------------------------------
# Example run
# ----------------------------------------------------------------------------
if __name__ == "__main__":
    key = jax.random.PRNGKey(0)
    key, kx, kp = jax.random.split(key, 3)

    num_nodes = 16
    num_graphs = 2
    nodes_per_graph = num_nodes // num_graphs

    # Node features (N, input_dim)
    x = jax.random.normal(kx, (num_nodes, INPUT_DIM), jnp.float32)

    # Two ring graphs (bidirectional edges), nodes 0..7 and 8..15.
    srcs, dsts = [], []
    for g in range(num_graphs):
        base = g * nodes_per_graph
        for i in range(nodes_per_graph):
            a_node = base + i
            b_node = base + (i + 1) % nodes_per_graph
            srcs += [a_node, b_node]
            dsts += [b_node, a_node]
    edge_index = jnp.array([srcs, dsts], dtype=jnp.int32)   # (2, E)

    batch = jnp.array([0] * nodes_per_graph + [1] * nodes_per_graph,
                      dtype=jnp.int32)

    params = init_params(kp)

    out = advanced_gcn_forward(params, x, edge_index, batch,
                               num_graphs=num_graphs)
    out = jax.block_until_ready(out)
    assert out.shape == (num_graphs, OUTPUT_DIM)
    assert out.dtype == jnp.float32
    assert bool(jnp.all(jnp.isfinite(out)))
    print("KERNEL_OK")
</pallas_src>

<mosaic_0001>
module attributes {stable_mosaic.version = 11 : i64} {
  func.func @_fused_gcn_kernel(%arg0: i32, %arg1: memref<64x128xbf16, #tpu.memory_space<vmem>>, %arg2: memref<128x128xbf16, #tpu.memory_space<vmem>>, %arg3: memref<5x64x64xbf16, #tpu.memory_space<vmem>>, %arg4: memref<5x64x64xbf16, #tpu.memory_space<vmem>>, %arg5: memref<5x64x1xf32, #tpu.memory_space<vmem>>, %arg6: memref<5x64x1xf32, #tpu.memory_space<vmem>>, %arg7: memref<5x64x1xf32, #tpu.memory_space<vmem>>, %arg8: memref<128x2xf32, #tpu.memory_space<vmem>>, %arg9: memref<64x1xf32, #tpu.memory_space<vmem>>, %arg10: memref<1x1xf32, #tpu.memory_space<vmem>>, %arg11: memref<1x2xf32, #tpu.memory_space<vmem>>, %arg12: memref<64x128xbf16, #tpu.memory_space<vmem>>) attributes {dimension_semantics = [#tpu.dimension_semantics<arbitrary>], iteration_bounds = array<i64: 5>, scalar_prefetch = 0 : i64, scratch_operands = 1 : i64, tpu.core_type = #tpu.core_type<tc>, window_params = [{pipeline_mode = #tpu.pipeline_mode<synchronous>, transform_indices = @transform_0, window_bounds = array<i64: 64, 128>}, {pipeline_mode = #tpu.pipeline_mode<synchronous>, transform_indices = @transform_1, window_bounds = array<i64: 128, 128>}, {pipeline_mode = #tpu.pipeline_mode<synchronous>, transform_indices = @transform_2, window_bounds = array<i64: 5, 64, 64>}, {pipeline_mode = #tpu.pipeline_mode<synchronous>, transform_indices = @transform_3, window_bounds = array<i64: 5, 64, 64>}, {pipeline_mode = #tpu.pipeline_mode<synchronous>, transform_indices = @transform_4, window_bounds = array<i64: 5, 64, 1>}, {pipeline_mode = #tpu.pipeline_mode<synchronous>, transform_indices = @transform_5, window_bounds = array<i64: 5, 64, 1>}, {pipeline_mode = #tpu.pipeline_mode<synchronous>, transform_indices = @transform_6, window_bounds = array<i64: 5, 64, 1>}, {pipeline_mode = #tpu.pipeline_mode<synchronous>, transform_indices = @transform_7, window_bounds = array<i64: 128, 2>}, {pipeline_mode = #tpu.pipeline_mode<synchronous>, transform_indices = @transform_8, window_bounds = array<i64: 64, 1>}, {pipeline_mode = #tpu.pipeline_mode<synchronous>, transform_indices = @transform_9, window_bounds = array<i64: 1, 1>}, {pipeline_mode = #tpu.pipeline_mode<synchronous>, transform_indices = @transform_10, window_bounds = array<i64: 1, 2>}]} {
    %c0_i32 = arith.constant 0 : i32
    %0 = arith.cmpi eq, %arg0, %c0_i32 : i32
    %1 = arith.extui %0 : i1 to i32
    %c0_i32_0 = arith.constant 0 : i32
    %2 = arith.cmpi ne, %1, %c0_i32_0 : i32
    scf.if %2 {
      %c0_25 = arith.constant 0 : index
      %c0_26 = arith.constant 0 : index
      %65 = vector.load %arg1[%c0_25, %c0_26] : memref<64x128xbf16, #tpu.memory_space<vmem>>, vector<64x128xbf16>
      %c0_27 = arith.constant 0 : index
      %c0_28 = arith.constant 0 : index
      %66 = vector.load %arg12[%c0_27, %c0_28] : memref<64x128xbf16, #tpu.memory_space<vmem>>, vector<64x128xbf16>
      tpu.vector_store %arg12[%c0_27, %c0_28], %65 {strides = array<i32>} : memref<64x128xbf16, #tpu.memory_space<vmem>>, vector<64x128xbf16>,
    } else {
    }
    %c0 = arith.constant 0 : index
    %c0_1 = arith.constant 0 : index
    %3 = vector.load %arg12[%c0, %c0_1] : memref<64x128xbf16, #tpu.memory_space<vmem>>, vector<64x128xbf16>
    %c0_2 = arith.constant 0 : index
    %c0_3 = arith.constant 0 : index
    %4 = vector.load %arg2[%c0_2, %c0_3] : memref<128x128xbf16, #tpu.memory_space<vmem>>, vector<128x128xbf16>
    %cst = arith.constant dense<0.000000e+00> : vector<64x128xf32>
    %5 = tpu.matmul %3, %4, %cst {dimension_numbers = #tpu.dot_dimension_numbers<[1], [0], [0], [1], [0, 0, 1, 1], [], []>} : vector<64x128xbf16>, vector<128x128xbf16>, vector<64x128xf32> -> vector<64x128xf32>
    %6 = arith.index_cast %arg0 : i32 to index
    %c0_4 = arith.constant 0 : index
    %c0_5 = arith.constant 0 : index
    %7 = vector.load %arg3[%6, %c0_4, %c0_5] : memref<5x64x64xbf16, #tpu.memory_space<vmem>>, vector<1x64x64xbf16>
    %8 = vector.shape_cast %7 : vector<1x64x64xbf16> to vector<64x64xbf16>
    %9 = arith.truncf %5 : vector<64x128xf32> to vector<64x128xbf16>
    %cst_6 = arith.constant dense<0.000000e+00> : vector<64x128xf32>
    %10 = tpu.matmul %8, %9, %cst_6 {dimension_numbers = #tpu.dot_dimension_numbers<[1], [0], [0], [1], [0, 0, 1, 1], [], []>} : vector<64x64xbf16>, vector<64x128xbf16>, vector<64x128xf32> -> vector<64x128xf32>
    %11 = arith.index_cast %arg0 : i32 to index
    %c0_7 = arith.constant 0 : index
    %c0_8 = arith.constant 0 : index
    %12 = vector.load %arg4[%11, %c0_7, %c0_8] : memref<5x64x64xbf16, #tpu.memory_space<vmem>>, vector<1x64x64xbf16>
    %13 = vector.shape_cast %12 : vector<1x64x64xbf16> to vector<64x64xbf16>
    %cst_9 = arith.constant dense<0.000000e+00> : vector<64x128xf32>
    %14 = tpu.matmul %13, %3, %cst_9 {dimension_numbers = #tpu.dot_dimension_numbers<[1], [0], [0], [1], [0, 0, 1, 1], [], []>} : vector<64x64xbf16>, vector<64x128xbf16>, vector<64x128xf32> -> vector<64x128xf32>
    %15 = arith.addf %10, %14 : vector<64x128xf32>
    %16 = arith.index_cast %arg0 : i32 to index
    %c0_10 = arith.constant 0 : index
    %c0_11 = arith.constant 0 : index
    %17 = vector.load %arg5[%16, %c0_10, %c0_11] : memref<5x64x1xf32, #tpu.memory_space<vmem>>, vector<1x64x1xf32>
    %18 = vector.shape_cast %17 : vector<1x64x1xf32> to vector<64x1xf32>
    %19 = vector.broadcast %18 : vector<64x1xf32> to vector<64x128xf32>
    %20 = arith.addf %15, %19 : vector<64x128xf32>
    %21 = tpu.iota {dimensions = array<i32: 1>} : vector<1x128xi32>
    %c16_i32 = arith.constant 16 : i32
    %22 = vector.broadcast %c16_i32 : i32 to vector<1x128xi32>
    %23 = arith.cmpi slt, %21, %22 : vector<1x128xi32>
    %24 = arith.extui %23 : vector<1x128xi1> to vector<1x128xi32>
    %25 = arith.sitofp %24 : vector<1x128xi32> to vector<1x128xf32>
    %26 = vector.broadcast %25 : vector<1x128xf32> to vector<64x128xf32>
    %27 = arith.mulf %20, %26 : vector<64x128xf32>
    %cst_12 = arith.constant dense<0.000000e+00> : vector<64xf32>
    %28 = vector.multi_reduction <add>, %27, %cst_12 [1] : vector<64x128xf32> to vector<64xf32>
    %29 = vector.shape_cast %28 : vector<64xf32> to vector<64x1xf32>
    %cst_13 = arith.constant 6.250000e-02 : f32
    %30 = vector.broadcast %cst_13 : f32 to vector<64x1xf32>
    %31 = arith.mulf %29, %30 : vector<64x1xf32>
    %32 = vector.broadcast %31 : vector<64x1xf32> to vector<64x128xf32>
    %33 = arith.subf %20, %32 : vector<64x128xf32>
    %34 = vector.broadcast %25 : vector<1x128xf32> to vector<64x128xf32>
    %35 = arith.mulf %33, %34 : vector<64x128xf32>
    %36 = arith.mulf %35, %35 : vector<64x128xf32>
    %cst_14 = arith.constant dense<0.000000e+00> : vector<64xf32>
    %37 = vector.multi_reduction <add>, %36, %cst_14 [1] : vector<64x128xf32> to vector<64xf32>
    %38 = vector.shape_cast %37 : vector<64xf32> to vector<64x1xf32>
    %cst_15 = arith.constant 6.250000e-02 : f32
    %39 = vector.broadcast %cst_15 : f32 to vector<64x1xf32>
    %40 = arith.mulf %38, %39 : vector<64x1xf32>
    %cst_16 = arith.constant 9.99999974E-6 : f32
    %41 = vector.broadcast %cst_16 : f32 to vector<64x1xf32>
    %42 = arith.addf %40, %41 : vector<64x1xf32>
    %43 = math.rsqrt %42 : vector<64x1xf32>
    %44 = arith.index_cast %arg0 : i32 to index
    %c0_17 = arith.constant 0 : index
    %c0_18 = arith.constant 0 : index
    %45 = vector.load %arg6[%44, %c0_17, %c0_18] : memref<5x64x1xf32, #tpu.memory_space<vmem>>, vector<1x64x1xf32>
    %46 = vector.shape_cast %45 : vector<1x64x1xf32> to vector<64x1xf32>
    %47 = arith.mulf %43, %46 : vector<64x1xf32>
    %48 = vector.broadcast %47 : vector<64x1xf32> to vector<64x128xf32>
    %49 = arith.mulf %35, %48 : vector<64x128xf32>
    %50 = arith.index_cast %arg0 : i32 to index
    %c0_19 = arith.constant 0 : index
    %c0_20 = arith.constant 0 : index
    %51 = vector.load %arg7[%50, %c0_19, %c0_20] : memref<5x64x1xf32, #tpu.memory_space<vmem>>, vector<1x64x1xf32>
    %52 = vector.shape_cast %51 : vector<1x64x1xf32> to vector<64x1xf32>
    %53 = vector.broadcast %52 : vector<64x1xf32> to vector<64x128xf32>
    %54 = arith.addf %49, %53 : vector<64x128xf32>
    %cst_21 = arith.constant 0.000000e+00 : f32
    %55 = vector.broadcast %cst_21 : f32 to vector<64x128xf32>
    %56 = arith.maximumf %54, %55 : vector<64x128xf32>
    %57 = vector.broadcast %25 : vector<1x128xf32> to vector<64x128xf32>
    %58 = arith.mulf %56, %57 : vector<64x128xf32>
    %c4_i32 = arith.constant 4 : i32
    %59 = arith.cmpi slt, %arg0, %c4_i32 : i32
    %60 = arith.extui %59 : i1 to i32
    %c0_i32_22 = arith.constant 0 : i32
    %61 = arith.cmpi ne, %60, %c0_i32_22 : i32
    scf.if %61 {
      %65 = arith.truncf %58 : vector<64x128xf32> to vector<64x128xbf16>
      %c0_25 = arith.constant 0 : index
      %c0_26 = arith.constant 0 : index
      %66 = vector.load %arg12[%c0_25, %c0_26] : memref<64x128xbf16, #tpu.memory_space<vmem>>, vector<64x128xbf16>
      tpu.vector_store %arg12[%c0_25, %c0_26], %65 {strides = array<i32>} : memref<64x128xbf16, #tpu.memory_space<vmem>>, vector<64x128xbf16>,
    } else {
    }
    %c4_i32_23 = arith.constant 4 : i32
    %62 = arith.cmpi eq, %arg0, %c4_i32_23 : i32
    %63 = arith.extui %62 : i1 to i32
    %c0_i32_24 = arith.constant 0 : i32
    %64 = arith.cmpi ne, %63, %c0_i32_24 : i32
    scf.if %64 {
      %c0_25 = arith.constant 0 : index
      %c0_26 = arith.constant 0 : index
      %65 = vector.load %arg8[%c0_25, %c0_26] : memref<128x2xf32, #tpu.memory_space<vmem>>, vector<128x2xf32>
      %cst_27 = arith.constant dense<0.000000e+00> : vector<64x2xf32>
      %66 = tpu.matmul %58, %65, %cst_27 {dimension_numbers = #tpu.dot_dimension_numbers<[1], [0], [0], [1], [0, 0, 1, 1], [], []>} : vector<64x128xf32>, vector<128x2xf32>, vector<64x2xf32> -> vector<64x2xf32>
      %c0_28 = arith.constant 0 : index
      %c0_29 = arith.constant 0 : index
      %67 = vector.load %arg9[%c0_28, %c0_29] : memref<64x1xf32, #tpu.memory_space<vmem>>, vector<64x1xf32>
      %68 = vector.broadcast %67 : vector<64x1xf32> to vector<64x2xf32>
      %69 = arith.mulf %66, %68 : vector<64x2xf32>
      %cst_30 = arith.constant dense<0.000000e+00> : vector<2xf32>
      %70 = vector.multi_reduction <add>, %69, %cst_30 [0] : vector<64x2xf32> to vector<2xf32>
      %71 = vector.shape_cast %70 : vector<2xf32> to vector<1x2xf32>
      %c0_31 = arith.constant 0 : index
      %c0_32 = arith.constant 0 : index
      %72 = vector.load %arg10[%c0_31, %c0_32] : memref<1x1xf32, #tpu.memory_space<vmem>>, vector<1x1xf32>
      %73 = vector.broadcast %72 : vector<1x1xf32> to vector<1x2xf32>
      %74 = arith.addf %71, %73 : vector<1x2xf32>
      %c0_33 = arith.constant 0 : index
      %c0_34 = arith.constant 0 : index
      %75 = vector.load %arg11[%c0_33, %c0_34] : memref<1x2xf32, #tpu.memory_space<vmem>>, vector<1x2xf32>
      tpu.vector_store %arg11[%c0_33, %c0_34], %74 {strides = array<i32>} : memref<1x2xf32, #tpu.memory_space<vmem>>, vector<1x2xf32>,
    } else {
    }
    return
  }
  func.func @transform_0(%arg0: i32) -> (i32, i32) {
    %c0_i32 = arith.constant 0 : i32
    %c0_i32_0 = arith.constant 0 : i32
    %c0_i32_1 = arith.constant 0 : i32
    return %c0_i32, %c0_i32_0 : i32, i32
  }
  func.func @transform_1(%arg0: i32) -> (i32, i32) {
    %c0_i32 = arith.constant 0 : i32
    %c0_i32_0 = arith.constant 0 : i32
    %c0_i32_1 = arith.constant 0 : i32
    return %c0_i32, %c0_i32_0 : i32, i32
  }
  func.func @transform_2(%arg0: i32) -> (i32, i32, i32) {
    %c0_i32 = arith.constant 0 : i32
    %c0_i32_0 = arith.constant 0 : i32
    %c0_i32_1 = arith.constant 0 : i32
    %c0_i32_2 = arith.constant 0 : i32
    return %c0_i32, %c0_i32_0, %c0_i32_1 : i32, i32, i32
  }
  func.func @transform_3(%arg0: i32) -> (i32, i32, i32) {
    %c0_i32 = arith.constant 0 : i32
    %c0_i32_0 = arith.constant 0 : i32
    %c0_i32_1 = arith.constant 0 : i32
    %c0_i32_2 = arith.constant 0 : i32
    return %c0_i32, %c0_i32_0, %c0_i32_1 : i32, i32, i32
  }
  func.func @transform_4(%arg0: i32) -> (i32, i32, i32) {
    %c0_i32 = arith.constant 0 : i32
    %c0_i32_0 = arith.constant 0 : i32
    %c0_i32_1 = arith.constant 0 : i32
    %c0_i32_2 = arith.constant 0 : i32
    return %c0_i32, %c0_i32_0, %c0_i32_1 : i32, i32, i32
  }
  func.func @transform_5(%arg0: i32) -> (i32, i32, i32) {
    %c0_i32 = arith.constant 0 : i32
    %c0_i32_0 = arith.constant 0 : i32
    %c0_i32_1 = arith.constant 0 : i32
    %c0_i32_2 = arith.constant 0 : i32
    return %c0_i32, %c0_i32_0, %c0_i32_1 : i32, i32, i32
  }
  func.func @transform_6(%arg0: i32) -> (i32, i32, i32) {
    %c0_i32 = arith.constant 0 : i32
    %c0_i32_0 = arith.constant 0 : i32
    %c0_i32_1 = arith.constant 0 : i32
    %c0_i32_2 = arith.constant 0 : i32
    return %c0_i32, %c0_i32_0, %c0_i32_1 : i32, i32, i32
  }
  func.func @transform_7(%arg0: i32) -> (i32, i32) {
    %c0_i32 = arith.constant 0 : i32
    %c0_i32_0 = arith.constant 0 : i32
    %c0_i32_1 = arith.constant 0 : i32
    return %c0_i32, %c0_i32_0 : i32, i32
  }
  func.func @transform_8(%arg0: i32) -> (i32, i32) {
    %c0_i32 = arith.constant 0 : i32
    %c0_i32_0 = arith.constant 0 : i32
    %c0_i32_1 = arith.constant 0 : i32
    return %c0_i32, %c0_i32_0 : i32, i32
  }
  func.func @transform_9(%arg0: i32) -> (i32, i32) {
    %c0_i32 = arith.constant 0 : i32
    %c0_i32_0 = arith.constant 0 : i32
    %c0_i32_1 = arith.constant 0 : i32
    return %c0_i32, %c0_i32_0 : i32, i32
  }
  func.func @transform_10(%arg0: i32) -> (i32, i32) {
    %c0_i32 = arith.constant 0 : i32
    %c0_i32_0 = arith.constant 0 : i32
    %c0_i32_1 = arith.constant 0 : i32
    return %c0_i32, %c0_i32_0 : i32, i32
  }
}

</mosaic_0001>

<llo_original>
// kernel: advanced_gcn_forward.1
$region0: #{advanced_gcn_forward.1}
  #allocation0 [shape = 'u32[]', space=smem, size = 0x4, offset = 0x4, fixed_abs, tag = 'smem constant byte address 0x4 - core index']
  #allocation1 [shape = 'u32[72,128]{1,0:T(1,128)}', space=vmem, size = 0x9000, scoped, tag = 'internal scratch']
  #allocation2 [shape = 'bf16[64,128]{1,0:T(8,128)(2,1)}', space=vmem, size = 0x4000, scoped, tag = 'scratch operand']
  #allocation3 [shape = 'f32[1,1]{1,0:T(1,128)S(1)}', space=vmem, size = 0x200, scoped, tag = 'scoped memory for advanced_gcn_forward.1']
  %s0 = inlined_call_operand.vmem [shape: bf16[64,128], index: 0, kind: input, shape index: {}]
  %s1 = inlined_call_operand.vmem [shape: bf16[128,128], index: 1, kind: input, shape index: {}]
  %s2 = inlined_call_operand.vmem [shape: bf16[5,64,64], index: 2, kind: input, shape index: {}]
  %s3 = inlined_call_operand.vmem [shape: bf16[5,64,64], index: 3, kind: input, shape index: {}]
  %s4 = inlined_call_operand.vmem [shape: f32[5,64,1], index: 4, kind: input, shape index: {}]
  %s5 = inlined_call_operand.vmem [shape: f32[5,64,1], index: 5, kind: input, shape index: {}]
  %s6 = inlined_call_operand.vmem [shape: f32[5,64,1], index: 6, kind: input, shape index: {}]
  %s7 = inlined_call_operand.vmem [shape: f32[128,2], index: 7, kind: input, shape index: {}]
  %s8 = inlined_call_operand.vmem [shape: f32[64,1], index: 8, kind: input, shape index: {}]
  %s9 = inlined_call_operand.<no memory space> [shape: f32[1,1], index: 9, kind: input, shape index: {}]
  %s10 = inlined_call_operand.hbm [shape: f32[1,2], index: 10, kind: output, shape index: {}]
  %s11 = sld [smem:[#allocation0]]
  $region85: #{advanced_gcn_forward.1} parent=0
    _
  %s13 = ssub.s32 1, %s11
  %s14 = scalar_select 0, %s13, %s11
  %v15 = vstv %s9
  %16 = vst [vmem:[#allocation3] sm:$0x1] %v15
  $region1: #{advanced_gcn_forward.1} parent=0
    #allocation4 [shape = 'u8[512]{0}', space=vmem, size = 0x400, scoped, tag = 'output window, operand 0, single buffered']
    #allocation5 [shape = 's32[2]{0}', space=sflag, size = 0x8, scoped, tag = 'scoped memory for advanced_gcn_forward.1']
    %17 = vsyncpa [#allocation5], 0
    loop: start=0, step=1, limit=7
    $region2: #{advanced_gcn_forward.1} parent=1 // loop_pre_header
      _
    $region3: #{advanced_gcn_forward.1} parent=1 // loop_header
      %s19 = sphi 0, %s23
      %p20 = scmp.ge.s32.totalorder %s19, 7
      %s27 = sphi 0, %s27
      %s29 = sphi 0, %s27
      %s30 = sphi 0, %s29
      %s44 = sphi 0, %s30
      %s48 = sphi 0, %s48
      %s50 = sphi 0, %s48
      %s51 = sphi 0, %s50
      %s65 = sphi 0, %s51
      %s69 = sphi 0, %s69
      %s71 = sphi 0, %s69
      %s72 = sphi 0, %s71
      %s86 = sphi 0, %s72
      %s90 = sphi 0, %s90
      %s92 = sphi 0, %s90
      %s93 = sphi 0, %s92
      %s107 = sphi 0, %s93
      %s111 = sphi 0, %s111
      %s113 = sphi 0, %s111
      %s114 = sphi 0, %s113
      %s128 = sphi 0, %s114
      %s132 = sphi 0, %s132
      %s134 = sphi 0, %s132
      %s135 = sphi 0, %s134
      %s149 = sphi 0, %s135
      %s153 = sphi 0, %s153
      %s155 = sphi 0, %s153
      %s156 = sphi 0, %s155
      %s170 = sphi 0, %s156
      %s174 = sphi 0, %s174
      %s176 = sphi 0, %s174
      %s177 = sphi 0, %s176
      %s191 = sphi 0, %s177
      %s195 = sphi 0, %s195
      %s197 = sphi 0, %s195
      %s198 = sphi 0, %s197
      %s212 = sphi 0, %s198
      %s216 = sphi 0, %s216
      %s218 = sphi 0, %s216
      %s219 = sphi 0, %s218
      %s233 = sphi 0, %s219
      %s237 = sphi 0, %s237
      %s239 = sphi 0, %s237
      %s240 = sphi 0, %s239
      %s254 = sphi 0, %s240
    $region4: #{advanced_gcn_forward.1} parent=1 // loop_header_branch
      %22 = sbr.rel (%p20) target = $region8
    $region5: #{advanced_gcn_forward.1} parent=1 // loop_body
      %s24 = ssub.s32 %s19, 1
      %s25 = ssub.s32 %s19, 2
      %s26 = sadd.s32 %s19, 1
      %s28 = sadd.s32 %s27, 1
      %p31 = scmp.eq.s32.totalorder %s19, 4
      %p32 = scmp.ne.s32.totalorder %s27, %s29
      %p33 = scmp.eq.s32.totalorder %s19, 0
      %p34 = por %p32, %p33
      %p35 = scmp.ne.s32.totalorder %s27, %s29
      %p36 = scmp.eq.s32.totalorder %s24, 4
      %p37 = por %p35, %p36
      %p38 = scmp.ne.s32.totalorder %s29, %s30
      %p39 = scmp.eq.s32.totalorder %s24, 0
      %p40 = por %p38, %p39
      %p41 = scmp.ne.s32.totalorder %s29, %s30
      %p42 = scmp.eq.s32.totalorder %s25, 4
      %p43 = por %p41, %p42
      %p45 = scmp.ne.s32.totalorder %s30, %s44
      %p46 = scmp.eq.s32.totalorder %s25, 0
      %p47 = por %p45, %p46
      %s49 = sadd.s32 %s48, 1
      %p52 = scmp.eq.s32.totalorder %s19, 4
      %p53 = scmp.ne.s32.totalorder %s48, %s50
      %p54 = scmp.eq.s32.totalorder %s19, 0
      %p55 = por %p53, %p54
      %p56 = scmp.ne.s32.totalorder %s48, %s50
      %p57 = scmp.eq.s32.totalorder %s24, 4
      %p58 = por %p56, %p57
      %p59 = scmp.ne.s32.totalorder %s50, %s51
      %p60 = scmp.eq.s32.totalorder %s24, 0
      %p61 = por %p59, %p60
      %p62 = scmp.ne.s32.totalorder %s50, %s51
      %p63 = scmp.eq.s32.totalorder %s25, 4
      %p64 = por %p62, %p63
      %p66 = scmp.ne.s32.totalorder %s51, %s65
      %p67 = scmp.eq.s32.totalorder %s25, 0
      %p68 = por %p66, %p67
      %s70 = sadd.s32 %s69, 1
      %p73 = scmp.eq.s32.totalorder %s19, 4
      %p74 = scmp.ne.s32.totalorder %s69, %s71
      %p75 = scmp.eq.s32.totalorder %s19, 0
      %p76 = por %p74, %p75
      %p77 = scmp.ne.s32.totalorder %s69, %s71
      %p78 = scmp.eq.s32.totalorder %s24, 4
      %p79 = por %p77, %p78
      %p80 = scmp.ne.s32.totalorder %s71, %s72
      %p81 = scmp.eq.s32.totalorder %s24, 0
      %p82 = por %p80, %p81
      %p83 = scmp.ne.s32.totalorder %s71, %s72
      %p84 = scmp.eq.s32.totalorder %s25, 4
      %p85 = por %p83, %p84
      %p87 = scmp.ne.s32.totalorder %s72, %s86
      %p88 = scmp.eq.s32.totalorder %s25, 0
      %p89 = por %p87, %p88
      %s91 = sadd.s32 %s90, 1
      %p94 = scmp.eq.s32.totalorder %s19, 4
      %p95 = scmp.ne.s32.totalorder %s90, %s92
      %p96 = scmp.eq.s32.totalorder %s19, 0
      %p97 = por %p95, %p96
      %p98 = scmp.ne.s32.totalorder %s90, %s92
      %p99 = scmp.eq.s32.totalorder %s24, 4
      %p100 = por %p98, %p99
      %p101 = scmp.ne.s32.totalorder %s92, %s93
      %p102 = scmp.eq.s32.totalorder %s24, 0
      %p103 = por %p101, %p102
      %p104 = scmp.ne.s32.totalorder %s92, %s93
      %p105 = scmp.eq.s32.totalorder %s25, 4
      %p106 = por %p104, %p105
      %p108 = scmp.ne.s32.totalorder %s93, %s107
      %p109 = scmp.eq.s32.totalorder %s25, 0
      %p110 = por %p108, %p109
      %s112 = sadd.s32 %s111, 1
      %p115 = scmp.eq.s32.totalorder %s19, 4
      %p116 = scmp.ne.s32.totalorder %s111, %s113
      %p117 = scmp.eq.s32.totalorder %s19, 0
      %p118 = por %p116, %p117
      %p119 = scmp.ne.s32.totalorder %s111, %s113
      %p120 = scmp.eq.s32.totalorder %s24, 4
      %p121 = por %p119, %p120
      %p122 = scmp.ne.s32.totalorder %s113, %s114
      %p123 = scmp.eq.s32.totalorder %s24, 0
      %p124 = por %p122, %p123
      %p125 = scmp.ne.s32.totalorder %s113, %s114
      %p126 = scmp.eq.s32.totalorder %s25, 4
      %p127 = por %p125, %p126
      %p129 = scmp.ne.s32.totalorder %s114, %s128
      %p130 = scmp.eq.s32.totalorder %s25, 0
      %p131 = por %p129, %p130
      %s133 = sadd.s32 %s132, 1
      %p136 = scmp.eq.s32.totalorder %s19, 4
      %p137 = scmp.ne.s32.totalorder %s132, %s134
      %p138 = scmp.eq.s32.totalorder %s19, 0
      %p139 = por %p137, %p138
      %p140 = scmp.ne.s32.totalorder %s132, %s134
      %p141 = scmp.eq.s32.totalorder %s24, 4
      %p142 = por %p140, %p141
      %p143 = scmp.ne.s32.totalorder %s134, %s135
      %p144 = scmp.eq.s32.totalorder %s24, 0
      %p145 = por %p143, %p144
      %p146 = scmp.ne.s32.totalorder %s134, %s135
      %p147 = scmp.eq.s32.totalorder %s25, 4
      %p148 = por %p146, %p147
      %p150 = scmp.ne.s32.totalorder %s135, %s149
      %p151 = scmp.eq.s32.totalorder %s25, 0
      %p152 = por %p150, %p151
      %s154 = sadd.s32 %s153, 1
      %p157 = scmp.eq.s32.totalorder %s19, 4
      %p158 = scmp.ne.s32.totalorder %s153, %s155
      %p159 = scmp.eq.s32.totalorder %s19, 0
      %p160 = por %p158, %p159
      %p161 = scmp.ne.s32.totalorder %s153, %s155
      %p162 = scmp.eq.s32.totalorder %s24, 4
      %p163 = por %p161, %p162
      %p164 = scmp.ne.s32.totalorder %s155, %s156
      %p165 = scmp.eq.s32.totalorder %s24, 0
      %p166 = por %p164, %p165
      %p167 = scmp.ne.s32.totalorder %s155, %s156
      %p168 = scmp.eq.s32.totalorder %s25, 4
      %p169 = por %p167, %p168
      %p171 = scmp.ne.s32.totalorder %s156, %s170
      %p172 = scmp.eq.s32.totalorder %s25, 0
      %p173 = por %p171, %p172
      %s175 = sadd.s32 %s174, 1
      %p178 = scmp.eq.s32.totalorder %s19, 4
      %p179 = scmp.ne.s32.totalorder %s174, %s176
      %p180 = scmp.eq.s32.totalorder %s19, 0
      %p181 = por %p179, %p180
      %p182 = scmp.ne.s32.totalorder %s174, %s176
      %p183 = scmp.eq.s32.totalorder %s24, 4
      %p184 = por %p182, %p183
      %p185 = scmp.ne.s32.totalorder %s176, %s177
      %p186 = scmp.eq.s32.totalorder %s24, 0
      %p187 = por %p185, %p186
      %p188 = scmp.ne.s32.totalorder %s176, %s177
      %p189 = scmp.eq.s32.totalorder %s25, 4
      %p190 = por %p188, %p189
      %p192 = scmp.ne.s32.totalorder %s177, %s191
      %p193 = scmp.eq.s32.totalorder %s25, 0
      %p194 = por %p192, %p193
      %s196 = sadd.s32 %s195, 1
      %p199 = scmp.eq.s32.totalorder %s19, 4
      %p200 = scmp.ne.s32.totalorder %s195, %s197
      %p201 = scmp.eq.s32.totalorder %s19, 0
      %p202 = por %p200, %p201
      %p203 = scmp.ne.s32.totalorder %s195, %s197
      %p204 = scmp.eq.s32.totalorder %s24, 4
      %p205 = por %p203, %p204
      %p206 = scmp.ne.s32.totalorder %s197, %s198
      %p207 = scmp.eq.s32.totalorder %s24, 0
      %p208 = por %p206, %p207
      %p209 = scmp.ne.s32.totalorder %s197, %s198
      %p210 = scmp.eq.s32.totalorder %s25, 4
      %p211 = por %p209, %p210
      %p213 = scmp.ne.s32.totalorder %s198, %s212
      %p214 = scmp.eq.s32.totalorder %s25, 0
      %p215 = por %p213, %p214
      %s217 = sadd.s32 %s216, 1
      %p220 = scmp.eq.s32.totalorder %s19, 4
      %p221 = scmp.ne.s32.totalorder %s216, %s218
      %p222 = scmp.eq.s32.totalorder %s19, 0
      %p223 = por %p221, %p222
      %p224 = scmp.ne.s32.totalorder %s216, %s218
      %p225 = scmp.eq.s32.totalorder %s24, 4
      %p226 = por %p224, %p225
      %p227 = scmp.ne.s32.totalorder %s218, %s219
      %p228 = scmp.eq.s32.totalorder %s24, 0
      %p229 = por %p227, %p228
      %p230 = scmp.ne.s32.totalorder %s218, %s219
      %p231 = scmp.eq.s32.totalorder %s25, 4
      %p232 = por %p230, %p231
      %p234 = scmp.ne.s32.totalorder %s219, %s233
      %p235 = scmp.eq.s32.totalorder %s25, 0
      %p236 = por %p234, %p235
      %s238 = sadd.s32 %s237, 1
      %p241 = scmp.eq.s32.totalorder %s19, 4
      %p242 = scmp.ne.s32.totalorder %s237, %s239
      %p243 = scmp.eq.s32.totalorder %s19, 0
      %p244 = por %p242, %p243
      %p245 = scmp.ne.s32.totalorder %s237, %s239
      %p246 = scmp.eq.s32.totalorder %s24, 4
      %p247 = por %p245, %p246
      %p248 = scmp.ne.s32.totalorder %s239, %s240
      %p249 = scmp.eq.s32.totalorder %s24, 0
      %p250 = por %p248, %p249
      %p251 = scmp.ne.s32.totalorder %s239, %s240
      %p252 = scmp.eq.s32.totalorder %s25, 4
      %p253 = por %p251, %p252
      %p255 = scmp.ne.s32.totalorder %s240, %s254
      %p256 = scmp.eq.s32.totalorder %s25, 0
      %p257 = por %p255, %p256
      %p258 = scmp.le.s32.totalorder 1, %s19
      %p259 = scmp.lt.s32.totalorder %s19, 6
      %p260 = pnand %p258, %p259
      %p261 = pneg %p260
      // Predicated region
      $region9: #{advanced_gcn_forward.1} parent=5 // pred_check
        _
      $region10: #{advanced_gcn_forward.1} parent=5 // pred_check_branch
        %263 = sbr.rel (%p260) target = $region12
      $region11: #{advanced_gcn_forward.1} parent=5 // pred_region
        %s264 = ssub.s32 %s19, 1
        // Predicated region
        $region13: #{advanced_gcn_forward.1} parent=11 // pred_check
          %p265 = pneg %p40
        $region14: #{advanced_gcn_forward.1} parent=11 // pred_check_branch
          %267 = sbr.rel (%p265) target = $region16
        $region15: #{advanced_gcn_forward.1} parent=11 // pred_region
          _
        $region16: #{advanced_gcn_forward.1} parent=11 // pred_fallthru
          _
        // Predicated region
        $region17: #{advanced_gcn_forward.1} parent=11 // pred_check
          %p268 = pneg %p61
        $region18: #{advanced_gcn_forward.1} parent=11 // pred_check_branch
          %270 = sbr.rel (%p268) target = $region20
        $region19: #{advanced_gcn_forward.1} parent=11 // pred_region
          _
        $region20: #{advanced_gcn_forward.1} parent=11 // pred_fallthru
          _
        // Predicated region
        $region21: #{advanced_gcn_forward.1} parent=11 // pred_check
          %p271 = pneg %p82
        $region22: #{advanced_gcn_forward.1} parent=11 // pred_check_branch
          %273 = sbr.rel (%p271) target = $region24
        $region23: #{advanced_gcn_forward.1} parent=11 // pred_region
          _
        $region24: #{advanced_gcn_forward.1} parent=11 // pred_fallthru
          _
        // Predicated region
        $region25: #{advanced_gcn_forward.1} parent=11 // pred_check
          %p274 = pneg %p103
        $region26: #{advanced_gcn_forward.1} parent=11 // pred_check_branch
          %276 = sbr.rel (%p274) target = $region28
        $region27: #{advanced_gcn_forward.1} parent=11 // pred_region
          _
        $region28: #{advanced_gcn_forward.1} parent=11 // pred_fallthru
          _
        // Predicated region
        $region29: #{advanced_gcn_forward.1} parent=11 // pred_check
          %p277 = pneg %p124
        $region30: #{advanced_gcn_forward.1} parent=11 // pred_check_branch
          %279 = sbr.rel (%p277) target = $region32
        $region31: #{advanced_gcn_forward.1} parent=11 // pred_region
          _
        $region32: #{advanced_gcn_forward.1} parent=11 // pred_fallthru
          _
        // Predicated region
        $region33: #{advanced_gcn_forward.1} parent=11 // pred_check
          %p280 = pneg %p145
        $region34: #{advanced_gcn_forward.1} parent=11 // pred_check_branch
          %282 = sbr.rel (%p280) target = $region36
        $region35: #{advanced_gcn_forward.1} parent=11 // pred_region
          _
        $region36: #{advanced_gcn_forward.1} parent=11 // pred_fallthru
          _
        // Predicated region
        $region37: #{advanced_gcn_forward.1} parent=11 // pred_check
          %p283 = pneg %p166
        $region38: #{advanced_gcn_forward.1} parent=11 // pred_check_branch
          %285 = sbr.rel (%p283) target = $region40
        $region39: #{advanced_gcn_forward.1} parent=11 // pred_region
          _
        $region40: #{advanced_gcn_forward.1} parent=11 // pred_fallthru
          _
        // Predicated region
        $region41: #{advanced_gcn_forward.1} parent=11 // pred_check
          %p286 = pneg %p187
        $region42: #{advanced_gcn_forward.1} parent=11 // pred_check_branch
          %288 = sbr.rel (%p286) target = $region44
        $region43: #{advanced_gcn_forward.1} parent=11 // pred_region
          _
        $region44: #{advanced_gcn_forward.1} parent=11 // pred_fallthru
          _
        // Predicated region
        $region45: #{advanced_gcn_forward.1} parent=11 // pred_check
          %p289 = pneg %p208
        $region46: #{advanced_gcn_forward.1} parent=11 // pred_check_branch
          %291 = sbr.rel (%p289) target = $region48
        $region47: #{advanced_gcn_forward.1} parent=11 // pred_region
          _
        $region48: #{advanced_gcn_forward.1} parent=11 // pred_fallthru
          _
        // Predicated region
        $region49: #{advanced_gcn_forward.1} parent=11 // pred_check
          %p292 = pneg %p229
        $region50: #{advanced_gcn_forward.1} parent=11 // pred_check_branch
          %294 = sbr.rel (%p292) target = $region52
        $region51: #{advanced_gcn_forward.1} parent=11 // pred_region
          _
        $region52: #{advanced_gcn_forward.1} parent=11 // pred_fallthru
          _
      $region12: #{advanced_gcn_forward.1} parent=5 // pred_fallthru
        _
      %p295 = scmp.lt.s32.totalorder %s19, 5
      // Predicated region
      $region53: #{advanced_gcn_forward.1} parent=5 // pred_check
        %p296 = pneg %p295
      $region54: #{advanced_gcn_forward.1} parent=5 // pred_check_branch
        %298 = sbr.rel (%p296) target = $region56
      $region55: #{advanced_gcn_forward.1} parent=5 // pred_region
        _
      $region56: #{advanced_gcn_forward.1} parent=5 // pred_fallthru
        _
      %p299 = scmp.le.s32.totalorder 1, %s19
      %p300 = scmp.lt.s32.totalorder %s19, 6
      %p301 = pnand %p299, %p300
      %p302 = pneg %p301
      // Predicated region
      $region57: #{advanced_gcn_forward.1} parent=5 // pred_check
        _
      $region58: #{advanced_gcn_forward.1} parent=5 // pred_check_branch
        %304 = sbr.rel (%p301) target = $region60
      $region59: #{advanced_gcn_forward.1} parent=5 // pred_region
        %s305 = ssub.s32 %s19, 1
        %p306 = pneg %p40
        %p307 = pneg %p37
        %p308 = pneg %p61
        %p309 = pneg %p58
        %p310 = pneg %p82
        %p311 = pneg %p79
        %p312 = pneg %p103
        %p313 = pneg %p100
        %p314 = pneg %p124
        %p315 = pneg %p121
        %p316 = pneg %p145
        %p317 = pneg %p142
        %p318 = pneg %p166
        %p319 = pneg %p163
        %p320 = pneg %p187
        %p321 = pneg %p184
        %p322 = pneg %p208
        %p323 = pneg %p205
        %p324 = pneg %p229
        %p325 = pneg %p226
        %p326 = pneg %p250
        %p327 = pneg %p247
        %p329 = scmp.eq.s32.totalorder %s24, 0
        // Predicated region
        $region61: #{advanced_gcn_forward.1} parent=59 // pred_check
          %p330 = pneg %p329
        $region62: #{advanced_gcn_forward.1} parent=59 // pred_check_branch
          %332 = sbr.rel (%p330) target = $region64
        $region63: #{advanced_gcn_forward.1} parent=59 // pred_region
          %v333 = vld [vmem:[%s0] sm:$0xf]
          %v334 = vld [vmem:[%s0 + $0x4] sm:$0xf]
          %v335 = vld [vmem:[%s0 + $0x8] sm:$0xf]
          %v336 = vld [vmem:[%s0 + $0xc] sm:$0xf]
          %v337 = vld [vmem:[%s0 + $0x10] sm:$0xf]
          %v338 = vld [vmem:[%s0 + $0x14] sm:$0xf]
          %v339 = vld [vmem:[%s0 + $0x18] sm:$0xf]
          %v340 = vld [vmem:[%s0 + $0x1c] sm:$0xf]
          %341 = vst [vmem:[#allocation2] sm:$0xf] %v333
          %342 = vst [vmem:[#allocation2 + $0x4] sm:$0xf] %v334
          %343 = vst [vmem:[#allocation2 + $0x8] sm:$0xf] %v335
          %344 = vst [vmem:[#allocation2 + $0xc] sm:$0xf] %v336
          %345 = vst [vmem:[#allocation2 + $0x10] sm:$0xf] %v337
          %346 = vst [vmem:[#allocation2 + $0x14] sm:$0xf] %v338
          %347 = vst [vmem:[#allocation2 + $0x18] sm:$0xf] %v339
          %348 = vst [vmem:[#allocation2 + $0x1c] sm:$0xf] %v340
        $region64: #{advanced_gcn_forward.1} parent=59 // pred_fallthru
          _
        %v349 = vld [vmem:[#allocation2] sm:$0xf]
        %v350 = vld [vmem:[#allocation2 + $0x4] sm:$0xf]
        %v351 = vld [vmem:[#allocation2 + $0x8] sm:$0xf]
        %v352 = vld [vmem:[#allocation2 + $0xc] sm:$0xf]
        %v353 = vld [vmem:[#allocation2 + $0x10] sm:$0xf]
        %v354 = vld [vmem:[#allocation2 + $0x14] sm:$0xf]
        %v355 = vld [vmem:[#allocation2 + $0x18] sm:$0xf]
        %v356 = vld [vmem:[#allocation2 + $0x1c] sm:$0xf]
        %v357 = vld [vmem:[%s1] sm:$0xf]
        %v358 = vld [vmem:[%s1 + $0x4] sm:$0xf]
        %v359 = vld [vmem:[%s1 + $0x8] sm:$0xf]
        %v360 = vld [vmem:[%s1 + $0xc] sm:$0xf]
        %v361 = vld [vmem:[%s1 + $0x10] sm:$0xf]
        %v362 = vld [vmem:[%s1 + $0x14] sm:$0xf]
        %v363 = vld [vmem:[%s1 + $0x18] sm:$0xf]
        %v364 = vld [vmem:[%s1 + $0x1c] sm:$0xf]
        %v365 = vld [vmem:[%s1 + $0x20] sm:$0xf]
        %v366 = vld [vmem:[%s1 + $0x24] sm:$0xf]
        %v367 = vld [vmem:[%s1 + $0x28] sm:$0xf]
        %v368 = vld [vmem:[%s1 + $0x2c] sm:$0xf]
        %v369 = vld [vmem:[%s1 + $0x30] sm:$0xf]
        %v370 = vld [vmem:[%s1 + $0x34] sm:$0xf]
        %v371 = vld [vmem:[%s1 + $0x38] sm:$0xf]
        %v372 = vld [vmem:[%s1 + $0x3c] sm:$0xf]
        %v381 = vunpack.c.l.b16 %v349
        %v382 = vunpack.c.l.b16 %v350
        %v383 = vunpack.c.l.b16 %v351
        %v384 = vunpack.c.l.b16 %v352
        %v385 = vunpack.c.l.b16 %v353
        %v386 = vunpack.c.l.b16 %v354
        %v387 = vunpack.c.l.b16 %v355
        %v388 = vunpack.c.l.b16 %v356
        %v389 = vpack.c.b16 %v382, %v381
        %v390 = vpack.c.b16 %v384, %v383
        %v391 = vpack.c.b16 %v386, %v385
        %v392 = vpack.c.b16 %v388, %v387
        %v413 = vunpack.c.l.b16 %v357
        %v414 = vunpack.c.l.b16 %v358
        %v415 = vunpack.c.l.b16 %v359
        %v416 = vunpack.c.l.b16 %v360
        %v417 = vunpack.c.l.b16 %v361
        %v418 = vunpack.c.l.b16 %v362
        %v419 = vunpack.c.l.b16 %v363
        %v420 = vunpack.c.l.b16 %v364
        %v421 = vunpack.c.l.b16 %v365
        %v422 = vunpack.c.l.b16 %v366
        %v423 = vunpack.c.l.b16 %v367
        %v424 = vunpack.c.l.b16 %v368
        %v425 = vunpack.c.l.b16 %v369
        %v426 = vunpack.c.l.b16 %v370
        %v427 = vunpack.c.l.b16 %v371
        %v428 = vunpack.c.l.b16 %v372
        %v429 = vpack.c.b16 %v414, %v413
        %v430 = vpack.c.b16 %v416, %v415
        %v431 = vpack.c.b16 %v418, %v417
        %v432 = vpack.c.b16 %v420, %v419
        %v433 = vpack.c.b16 %v422, %v421
        %v434 = vpack.c.b16 %v424, %v423
        %v435 = vpack.c.b16 %v426, %v425
        %v436 = vpack.c.b16 %v428, %v427
        %445 = vmatpush.bf16.msra.mxu0 %v436
        %446 = vmatpush.bf16.msra.mxu0 %v435
        %447 = vmatpush.bf16.msra.mxu0 %v434
        %448 = vmatpush.bf16.msra.mxu0 %v433
        %449 = vmatpush.bf16.msra.mxu0 %v432
        %450 = vmatpush.bf16.msra.mxu0 %v431
        %451 = vmatpush.bf16.msra.mxu0 %v430
        %452 = vmatpush.bf16.msra.mxu0 %v429
        %453 = vmatmul.bf16.gmra.mxu0 %v389
        %v454 = vpop.f32.mrf.mxu0
        %v455 = vadd.f32 0.0, %v454
        %v456 = vpop.f32.mrf.mxu0
        %v457 = vadd.f32 0.0, %v456
        %458 = vmatmul.bf16.gmra.mxu0 %v390
        %v459 = vpop.f32.mrf.mxu0
        %v460 = vadd.f32 0.0, %v459
        %v461 = vpop.f32.mrf.mxu0
        %v462 = vadd.f32 0.0, %v461
        %463 = vmatmul.bf16.gmra.mxu0 %v391
        %v464 = vpop.f32.mrf.mxu0
        %v465 = vadd.f32 0.0, %v464
        %v466 = vpop.f32.mrf.mxu0
        %v467 = vadd.f32 0.0, %v466
        %468 = vmatmul.bf16.gmra.mxu0 %v392
        %v469 = vpop.f32.mrf.mxu0
        %v470 = vadd.f32 0.0, %v469
        %v471 = vpop.f32.mrf.mxu0
        %v472 = vadd.f32 0.0, %v471
        %473 = vdwg.mxu0
        %s474 = smul.u32 %s24, 8
        %s475 = smul.addr %s474, 4
        %s476 = scalar_lea.vmem %s2, %s475
        %v477 = vld [vmem:[%s476] sm:$0xf]
        %v478 = vld [vmem:[%s476 + $0x4] sm:$0xf]
        %v479 = vld [vmem:[%s476 + $0x8] sm:$0xf]
        %v480 = vld [vmem:[%s476 + $0xc] sm:$0xf]
        %v481 = vld [vmem:[%s476 + $0x10] sm:$0xf]
        %v482 = vld [vmem:[%s476 + $0x14] sm:$0xf]
        %v483 = vld [vmem:[%s476 + $0x18] sm:$0xf]
        %v484 = vld [vmem:[%s476 + $0x1c] sm:$0xf]
        %v485 = vpack.c.bf16 %v457, %v455
        %v486 = vpack.c.bf16 %v462, %v460
        %v487 = vpack.c.bf16 %v467, %v465
        %v488 = vpack.c.bf16 %v472, %v470
        %s489 = smul.addr %s474, 4
        %s490 = scalar_lea.vmem %s3, %s489
        %v491 = vld [vmem:[%s490] sm:$0xf]
        %v492 = vld [vmem:[%s490 + $0x4] sm:$0xf]
        %v493 = vld [vmem:[%s490 + $0x8] sm:$0xf]
        %v494 = vld [vmem:[%s490 + $0xc] sm:$0xf]
        %v495 = vld [vmem:[%s490 + $0x10] sm:$0xf]
        %v496 = vld [vmem:[%s490 + $0x14] sm:$0xf]
        %v497 = vld [vmem:[%s490 + $0x18] sm:$0xf]
        %v498 = vld [vmem:[%s490 + $0x1c] sm:$0xf]
        %v507 = vunpack.c.l.b16 %v491
        %v508 = vunpack.c.l.b16 %v492
        %v509 = vunpack.c.l.b16 %v493
        %v510 = vunpack.c.l.b16 %v494
        %v511 = vunpack.c.l.b16 %v495
        %v512 = vunpack.c.l.b16 %v496
        %v513 = vunpack.c.l.b16 %v497
        %v514 = vunpack.c.l.b16 %v498
        %v515 = vpack.c.b16 %v508, %v507
        %v516 = vpack.c.b16 %v510, %v509
        %v517 = vpack.c.b16 %v512, %v511
        %v518 = vpack.c.b16 %v514, %v513
        %vm519 = vcmask 523264
        %v521 = vsel %vm519, %v515, 0
        %v524 = vsel %vm519, %v516, 0
        %v527 = vsel %vm519, %v517, 0
        %v530 = vsel %vm519, %v518, 0
        %532 = vmatpush.bf16.msra.mxu0 0
        %533 = vmatpush.bf16.msra.mxu0 0
        %534 = vmatpush.bf16.msra.mxu0 0
        %535 = vmatpush.bf16.msra.mxu0 0
        %536 = vmatpush.bf16.msra.mxu0 %v392
        %537 = vmatpush.bf16.msra.mxu0 %v391
        %538 = vmatpush.bf16.msra.mxu0 %v390
        %539 = vmatpush.bf16.msra.mxu0 %v389
        %540 = vmatmul.bf16.gmra.mxu0 %v521
        %v541 = vpop.f32.mrf.mxu0
        %v542 = vadd.f32 0.0, %v541
        %v543 = vpop.f32.mrf.mxu0
        %v544 = vadd.f32 0.0, %v543
        %545 = vmatmul.bf16.gmra.mxu0 %v524
        %v546 = vpop.f32.mrf.mxu0
        %v547 = vadd.f32 0.0, %v546
        %v548 = vpop.f32.mrf.mxu0
        %v549 = vadd.f32 0.0, %v548
        %550 = vmatmul.bf16.gmra.mxu0 %v527
        %v551 = vpop.f32.mrf.mxu0
        %v552 = vadd.f32 0.0, %v551
        %v553 = vpop.f32.mrf.mxu0
        %v554 = vadd.f32 0.0, %v553
        %555 = vmatmul.bf16.gmra.mxu0 %v530
        %v556 = vpop.f32.mrf.mxu0
        %v557 = vadd.f32 0.0, %v556
        %v558 = vpop.f32.mrf.mxu0
        %v559 = vadd.f32 0.0, %v558
        %560 = vdwg.mxu0
        %v569 = vunpack.c.l.b16 %v477
        %v570 = vunpack.c.l.b16 %v478
        %v571 = vunpack.c.l.b16 %v479
        %v572 = vunpack.c.l.b16 %v480
        %v573 = vunpack.c.l.b16 %v481
        %v574 = vunpack.c.l.b16 %v482
        %v575 = vunpack.c.l.b16 %v483
        %v576 = vunpack.c.l.b16 %v484
        %v577 = vpack.c.b16 %v570, %v569
        %v578 = vpack.c.b16 %v572, %v571
        %v579 = vpack.c.b16 %v574, %v573
        %v580 = vpack.c.b16 %v576, %v575
        %v582 = vsel %vm519, %v577, 0
        %v585 = vsel %vm519, %v578, 0
        %v588 = vsel %vm519, %v579, 0
        %v591 = vsel %vm519, %v580, 0
        %593 = vmatpush.bf16.msra.mxu0 0
        %594 = vmatpush.bf16.msra.mxu0 0
        %595 = vmatpush.bf16.msra.mxu0 0
        %596 = vmatpush.bf16.msra.mxu0 0
        %597 = vmatpush.bf16.msra.mxu0 %v488
        %598 = vmatpush.bf16.msra.mxu0 %v487
        %599 = vmatpush.bf16.msra.mxu0 %v486
        %600 = vmatpush.bf16.msra.mxu0 %v485
        %601 = vmatmul.bf16.gmra.mxu0 %v582
        %v602 = vpop.f32.mrf.mxu0
        %v603 = vadd.f32 %v542, %v602
        %v604 = vpop.f32.mrf.mxu0
        %v605 = vadd.f32 %v544, %v604
        %606 = vmatmul.bf16.gmra.mxu0 %v585
        %v607 = vpop.f32.mrf.mxu0
        %v608 = vadd.f32 %v547, %v607
        %v609 = vpop.f32.mrf.mxu0
        %v610 = vadd.f32 %v549, %v609
        %611 = vmatmul.bf16.gmra.mxu0 %v588
        %v612 = vpop.f32.mrf.mxu0
        %v613 = vadd.f32 %v552, %v612
        %v614 = vpop.f32.mrf.mxu0
        %v615 = vadd.f32 %v554, %v614
        %616 = vmatmul.bf16.gmra.mxu0 %v591
        %v617 = vpop.f32.mrf.mxu0
        %v618 = vadd.f32 %v557, %v617
        %v619 = vpop.f32.mrf.mxu0
        %v620 = vadd.f32 %v559, %v619
        %621 = vdwg.mxu0
        %s622 = smul.u32 %s24, 64
        %s623 = scalar_lea.vmem %s4, %s622
        %v624 = vld [vmem:[%s623] sm:$0xff]
        %v625 = vld [vmem:[%s623 + $0x8] sm:$0xff]
        %v626 = vld [vmem:[%s623 + $0x10] sm:$0xff]
        %v627 = vld [vmem:[%s623 + $0x18] sm:$0xff]
        %v628 = vld [vmem:[%s623 + $0x20] sm:$0xff]
        %v629 = vld [vmem:[%s623 + $0x28] sm:$0xff]
        %v630 = vld [vmem:[%s623 + $0x30] sm:$0xff]
        %v631 = vld [vmem:[%s623 + $0x38] sm:$0xff]
        %633 = vset.pattern.permute.xlu0 0
        %634 = vperm.xlu0 %633, %v624
        %v635 = vpop.permute.xlu0 %634
        %638 = vset.pattern.permute.xlu0 0
        %639 = vperm.xlu0 %638, %v625
        %v640 = vpop.permute.xlu0 %639
        %643 = vset.pattern.permute.xlu0 0
        %644 = vperm.xlu0 %643, %v626
        %v645 = vpop.permute.xlu0 %644
        %648 = vset.pattern.permute.xlu0 0
        %649 = vperm.xlu0 %648, %v627
        %v650 = vpop.permute.xlu0 %649
        %653 = vset.pattern.permute.xlu0 0
        %654 = vperm.xlu0 %653, %v628
        %v655 = vpop.permute.xlu0 %654
        %658 = vset.pattern.permute.xlu0 0
        %659 = vperm.xlu0 %658, %v629
        %v660 = vpop.permute.xlu0 %659
        %663 = vset.pattern.permute.xlu0 0
        %664 = vperm.xlu0 %663, %v630
        %v665 = vpop.permute.xlu0 %664
        %668 = vset.pattern.permute.xlu0 0
        %669 = vperm.xlu0 %668, %v631
        %v670 = vpop.permute.xlu0 %669
        %v672 = vadd.f32 %v603, %v635
        %v673 = vadd.f32 %v605, %v640
        %v674 = vadd.f32 %v608, %v645
        %v675 = vadd.f32 %v610, %v650
        %v676 = vadd.f32 %v613, %v655
        %v677 = vadd.f32 %v615, %v660
        %v678 = vadd.f32 %v618, %v665
        %v679 = vadd.f32 %v620, %v670
        %v680 = vlaneseq
        %v681 = vand.u32 %v680, 127
        %vm682 = vcmp.lt.s32.totalorder %v681, 16
        %v683 = vsel %vm682, 1, 0
        %v684 = vcvt.s32.f32 %v683
        %v685 = vmul.f32 %v672, %v684
        %v686 = vmul.f32 %v673, %v684
        %v687 = vmul.f32 %v674, %v684
        %v688 = vmul.f32 %v675, %v684
        %v689 = vmul.f32 %v676, %v684
        %v690 = vmul.f32 %v677, %v684
        %v691 = vmul.f32 %v678, %v684
        %v692 = vmul.f32 %v679, %v684
        %693 = vadd.xlane.f32.xlu0 %v685
        %v694 = vpop.xlane.xlu0 %693
        %695 = vadd.xlane.f32.xlu0 %v686
        %v696 = vpop.xlane.xlu0 %695
        %697 = vadd.xlane.f32.xlu0 %v687
        %v698 = vpop.xlane.xlu0 %697
        %699 = vadd.xlane.f32.xlu0 %v688
        %v700 = vpop.xlane.xlu0 %699
        %701 = vadd.xlane.f32.xlu0 %v689
        %v702 = vpop.xlane.xlu0 %701
        %703 = vadd.xlane.f32.xlu0 %v690
        %v704 = vpop.xlane.xlu0 %703
        %705 = vadd.xlane.f32.xlu0 %v691
        %v706 = vpop.xlane.xlu0 %705
        %707 = vadd.xlane.f32.xlu0 %v692
        %v708 = vpop.xlane.xlu0 %707
        %v709 = vmul.f32 %v694, 0.0625
        %v710 = vmul.f32 %v696, 0.0625
        %v711 = vmul.f32 %v698, 0.0625
        %v712 = vmul.f32 %v700, 0.0625
        %v713 = vmul.f32 %v702, 0.0625
        %v714 = vmul.f32 %v704, 0.0625
        %v715 = vmul.f32 %v706, 0.0625
        %v716 = vmul.f32 %v708, 0.0625
        %v717 = vsub.f32 %v672, %v709
        %v718 = vsub.f32 %v673, %v710
        %v719 = vsub.f32 %v674, %v711
        %v720 = vsub.f32 %v675, %v712
        %v721 = vsub.f32 %v676, %v713
        %v722 = vsub.f32 %v677, %v714
        %v723 = vsub.f32 %v678, %v715
        %v724 = vsub.f32 %v679, %v716
        %v725 = vmul.f32 %v717, %v684
        %v726 = vmul.f32 %v718, %v684
        %v727 = vmul.f32 %v719, %v684
        %v728 = vmul.f32 %v720, %v684
        %v729 = vmul.f32 %v721, %v684
        %v730 = vmul.f32 %v722, %v684
        %v731 = vmul.f32 %v723, %v684
        %v732 = vmul.f32 %v724, %v684
        %v733 = vmul.f32 %v725, %v725
        %v734 = vmul.f32 %v726, %v726
        %v735 = vmul.f32 %v727, %v727
        %v736 = vmul.f32 %v728, %v728
        %v737 = vmul.f32 %v729, %v729
        %v738 = vmul.f32 %v730, %v730
        %v739 = vmul.f32 %v731, %v731
        %v740 = vmul.f32 %v732, %v732
        %741 = vadd.xlane.f32.xlu0 %v733
        %v742 = vpop.xlane.xlu0 %741
        %743 = vadd.xlane.f32.xlu0 %v734
        %v744 = vpop.xlane.xlu0 %743
        %745 = vadd.xlane.f32.xlu0 %v735
        %v746 = vpop.xlane.xlu0 %745
        %747 = vadd.xlane.f32.xlu0 %v736
        %v748 = vpop.xlane.xlu0 %747
        %749 = vadd.xlane.f32.xlu0 %v737
        %v750 = vpop.xlane.xlu0 %749
        %751 = vadd.xlane.f32.xlu0 %v738
        %v752 = vpop.xlane.xlu0 %751
        %753 = vadd.xlane.f32.xlu0 %v739
        %v754 = vpop.xlane.xlu0 %753
        %755 = vadd.xlane.f32.xlu0 %v740
        %v756 = vpop.xlane.xlu0 %755
        %v757 = vmul.f32 %v742, 0.0625
        %v758 = vmul.f32 %v744, 0.0625
        %v759 = vmul.f32 %v746, 0.0625
        %v760 = vmul.f32 %v748, 0.0625
        %v761 = vmul.f32 %v750, 0.0625
        %v762 = vmul.f32 %v752, 0.0625
        %v763 = vmul.f32 %v754, 0.0625
        %v764 = vmul.f32 %v756, 0.0625
        %v765 = vadd.f32 %v757, 1e-05
        %v766 = vadd.f32 %v758, 1e-05
        %v767 = vadd.f32 %v759, 1e-05
        %v768 = vadd.f32 %v760, 1e-05
        %v769 = vadd.f32 %v761, 1e-05
        %v770 = vadd.f32 %v762, 1e-05
        %v771 = vadd.f32 %v763, 1e-05
        %v772 = vadd.f32 %v764, 1e-05
        %v773 = vrsqrt.pop %v765
        %v774 = vmul.f32 %v773, %v765
        %v775 = vmul.f32 %v774, %v773
        %v776 = vmul.f32 0.5, %v775
        %v777 = vsub.f32 1.5, %v776
        %v778 = vmul.f32 %v773, %v777
        %vm779 = vweird.f32 %v765
        %vm780 = vweird.f32 %v773
        %vm781 = vmor %vm779, %vm780
        %v782 = vsel %vm781, %v773, %v778
        %v783 = vrsqrt.pop %v766
        %v784 = vmul.f32 %v783, %v766
        %v785 = vmul.f32 %v784, %v783
        %v786 = vmul.f32 0.5, %v785
        %v787 = vsub.f32 1.5, %v786
        %v788 = vmul.f32 %v783, %v787
        %vm789 = vweird.f32 %v766
        %vm790 = vweird.f32 %v783
        %vm791 = vmor %vm789, %vm790
        %v792 = vsel %vm791, %v783, %v788
        %v793 = vrsqrt.pop %v767
        %v794 = vmul.f32 %v793, %v767
        %v795 = vmul.f32 %v794, %v793
        %v796 = vmul.f32 0.5, %v795
        %v797 = vsub.f32 1.5, %v796
        %v798 = vmul.f32 %v793, %v797
        %vm799 = vweird.f32 %v767
        %vm800 = vweird.f32 %v793
        %vm801 = vmor %vm799, %vm800
        %v802 = vsel %vm801, %v793, %v798
        %v803 = vrsqrt.pop %v768
        %v804 = vmul.f32 %v803, %v768
        %v805 = vmul.f32 %v804, %v803
        %v806 = vmul.f32 0.5, %v805
        %v807 = vsub.f32 1.5, %v806
        %v808 = vmul.f32 %v803, %v807
        %vm809 = vweird.f32 %v768
        %vm810 = vweird.f32 %v803
        %vm811 = vmor %vm809, %vm810
        %v812 = vsel %vm811, %v803, %v808
        %v813 = vrsqrt.pop %v769
        %v814 = vmul.f32 %v813, %v769
        %v815 = vmul.f32 %v814, %v813
        %v816 = vmul.f32 0.5, %v815
        %v817 = vsub.f32 1.5, %v816
        %v818 = vmul.f32 %v813, %v817
        %vm819 = vweird.f32 %v769
        %vm820 = vweird.f32 %v813
        %vm821 = vmor %vm819, %vm820
        %v822 = vsel %vm821, %v813, %v818
        %v823 = vrsqrt.pop %v770
        %v824 = vmul.f32 %v823, %v770
        %v825 = vmul.f32 %v824, %v823
        %v826 = vmul.f32 0.5, %v825
        %v827 = vsub.f32 1.5, %v826
        %v828 = vmul.f32 %v823, %v827
        %vm829 = vweird.f32 %v770
        %vm830 = vweird.f32 %v823
        %vm831 = vmor %vm829, %vm830
        %v832 = vsel %vm831, %v823, %v828
        %v833 = vrsqrt.pop %v771
        %v834 = vmul.f32 %v833, %v771
        %v835 = vmul.f32 %v834, %v833
        %v836 = vmul.f32 0.5, %v835
        %v837 = vsub.f32 1.5, %v836
        %v838 = vmul.f32 %v833, %v837
        %vm839 = vweird.f32 %v771
        %vm840 = vweird.f32 %v833
        %vm841 = vmor %vm839, %vm840
        %v842 = vsel %vm841, %v833, %v838
        %v843 = vrsqrt.pop %v772
        %v844 = vmul.f32 %v843, %v772
        %v845 = vmul.f32 %v844, %v843
        %v846 = vmul.f32 0.5, %v845
        %v847 = vsub.f32 1.5, %v846
        %v848 = vmul.f32 %v843, %v847
        %vm849 = vweird.f32 %v772
        %vm850 = vweird.f32 %v843
        %vm851 = vmor %vm849, %vm850
        %v852 = vsel %vm851, %v843, %v848
        %s853 = scalar_lea.vmem %s5, %s622
        %v854 = vld [vmem:[%s853] sm:$0xff]
        %v855 = vld [vmem:[%s853 + $0x8] sm:$0xff]
        %v856 = vld [vmem:[%s853 + $0x10] sm:$0xff]
        %v857 = vld [vmem:[%s853 + $0x18] sm:$0xff]
        %v858 = vld [vmem:[%s853 + $0x20] sm:$0xff]
        %v859 = vld [vmem:[%s853 + $0x28] sm:$0xff]
        %v860 = vld [vmem:[%s853 + $0x30] sm:$0xff]
        %v861 = vld [vmem:[%s853 + $0x38] sm:$0xff]
        %v862 = vmul.f32 %v782, %v854
        %v863 = vmul.f32 %v792, %v855
        %v864 = vmul.f32 %v802, %v856
        %v865 = vmul.f32 %v812, %v857
        %v866 = vmul.f32 %v822, %v858
        %v867 = vmul.f32 %v832, %v859
        %v868 = vmul.f32 %v842, %v860
        %v869 = vmul.f32 %v852, %v861
        %871 = vset.pattern.permute.xlu0 0
        %872 = vperm.xlu0 %871, %v862
        %v873 = vpop.permute.xlu0 %872
        %876 = vset.pattern.permute.xlu0 0
        %877 = vperm.xlu0 %876, %v863
        %v878 = vpop.permute.xlu0 %877
        %881 = vset.pattern.permute.xlu0 0
        %882 = vperm.xlu0 %881, %v864
        %v883 = vpop.permute.xlu0 %882
        %886 = vset.pattern.permute.xlu0 0
        %887 = vperm.xlu0 %886, %v865
        %v888 = vpop.permute.xlu0 %887
        %891 = vset.pattern.permute.xlu0 0
        %892 = vperm.xlu0 %891, %v866
        %v893 = vpop.permute.xlu0 %892
        %896 = vset.pattern.permute.xlu0 0
        %897 = vperm.xlu0 %896, %v867
        %v898 = vpop.permute.xlu0 %897
        %901 = vset.pattern.permute.xlu0 0
        %902 = vperm.xlu0 %901, %v868
        %v903 = vpop.permute.xlu0 %902
        %906 = vset.pattern.permute.xlu0 0
        %907 = vperm.xlu0 %906, %v869
        %v908 = vpop.permute.xlu0 %907
        %v910 = vmul.f32 %v725, %v873
        %v911 = vmul.f32 %v726, %v878
        %v912 = vmul.f32 %v727, %v883
        %v913 = vmul.f32 %v728, %v888
        %v914 = vmul.f32 %v729, %v893
        %v915 = vmul.f32 %v730, %v898
        %v916 = vmul.f32 %v731, %v903
        %v917 = vmul.f32 %v732, %v908
        %s918 = scalar_lea.vmem %s6, %s622
        %v919 = vld [vmem:[%s918] sm:$0xff]
        %v920 = vld [vmem:[%s918 + $0x8] sm:$0xff]
        %v921 = vld [vmem:[%s918 + $0x10] sm:$0xff]
        %v922 = vld [vmem:[%s918 + $0x18] sm:$0xff]
        %v923 = vld [vmem:[%s918 + $0x20] sm:$0xff]
        %v924 = vld [vmem:[%s918 + $0x28] sm:$0xff]
        %v925 = vld [vmem:[%s918 + $0x30] sm:$0xff]
        %v926 = vld [vmem:[%s918 + $0x38] sm:$0xff]
        %928 = vset.pattern.permute.xlu0 0
        %929 = vperm.xlu0 %928, %v919
        %v930 = vpop.permute.xlu0 %929
        %933 = vset.pattern.permute.xlu0 0
        %934 = vperm.xlu0 %933, %v920
        %v935 = vpop.permute.xlu0 %934
        %938 = vset.pattern.permute.xlu0 0
        %939 = vperm.xlu0 %938, %v921
        %v940 = vpop.permute.xlu0 %939
        %943 = vset.pattern.permute.xlu0 0
        %944 = vperm.xlu0 %943, %v922
        %v945 = vpop.permute.xlu0 %944
        %948 = vset.pattern.permute.xlu0 0
        %949 = vperm.xlu0 %948, %v923
        %v950 = vpop.permute.xlu0 %949
        %953 = vset.pattern.permute.xlu0 0
        %954 = vperm.xlu0 %953, %v924
        %v955 = vpop.permute.xlu0 %954
        %958 = vset.pattern.permute.xlu0 0
        %959 = vperm.xlu0 %958, %v925
        %v960 = vpop.permute.xlu0 %959
        %963 = vset.pattern.permute.xlu0 0
        %964 = vperm.xlu0 %963, %v926
        %v965 = vpop.permute.xlu0 %964
        %v967 = vadd.f32 %v910, %v930
        %v968 = vadd.f32 %v911, %v935
        %v969 = vadd.f32 %v912, %v940
        %v970 = vadd.f32 %v913, %v945
        %v971 = vadd.f32 %v914, %v950
        %v972 = vadd.f32 %v915, %v955
        %v973 = vadd.f32 %v916, %v960
        %v974 = vadd.f32 %v917, %v965
        %v975 = vmax.f32 %v967, 0.0
        %v976 = vmax.f32 %v968, 0.0
        %v977 = vmax.f32 %v969, 0.0
        %v978 = vmax.f32 %v970, 0.0
        %v979 = vmax.f32 %v971, 0.0
        %v980 = vmax.f32 %v972, 0.0
        %v981 = vmax.f32 %v973, 0.0
        %v982 = vmax.f32 %v974, 0.0
        %v983 = vmul.f32 %v975, %v684
        %v984 = vmul.f32 %v976, %v684
        %v985 = vmul.f32 %v977, %v684
        %v986 = vmul.f32 %v978, %v684
        %v987 = vmul.f32 %v979, %v684
        %v988 = vmul.f32 %v980, %v684
        %v989 = vmul.f32 %v981, %v684
        %v990 = vmul.f32 %v982, %v684
        %p991 = scmp.lt.s32.totalorder %s24, 4
        // Predicated region
        $region65: #{advanced_gcn_forward.1} parent=59 // pred_check
          %p992 = pneg %p991
        $region66: #{advanced_gcn_forward.1} parent=59 // pred_check_branch
          %994 = sbr.rel (%p992) target = $region68
        $region67: #{advanced_gcn_forward.1} parent=59 // pred_region
          %v995 = vpack.c.bf16 %v983, %v983
          %v996 = vpack.c.bf16 %v984, %v984
          %v997 = vpack.c.bf16 %v985, %v985
          %v998 = vpack.c.bf16 %v986, %v986
          %v999 = vpack.c.bf16 %v987, %v987
          %v1000 = vpack.c.bf16 %v988, %v988
          %v1001 = vpack.c.bf16 %v989, %v989
          %v1002 = vpack.c.bf16 %v990, %v990
          %1003 = vst [vmem:[#allocation2] sm:$0xf] %v995
          %1004 = vst [vmem:[#allocation2 + $0x4] sm:$0xf] %v996
          %1005 = vst [vmem:[#allocation2 + $0x8] sm:$0xf] %v997
          %1006 = vst [vmem:[#allocation2 + $0xc] sm:$0xf] %v998
          %1007 = vst [vmem:[#allocation2 + $0x10] sm:$0xf] %v999
          %1008 = vst [vmem:[#allocation2 + $0x14] sm:$0xf] %v1000
          %1009 = vst [vmem:[#allocation2 + $0x18] sm:$0xf] %v1001
          %1010 = vst [vmem:[#allocation2 + $0x1c] sm:$0xf] %v1002
        $region68: #{advanced_gcn_forward.1} parent=59 // pred_fallthru
          _
        %p1011 = scmp.eq.s32.totalorder %s24, 4
        // Predicated region
        $region69: #{advanced_gcn_forward.1} parent=59 // pred_check
          %p1012 = pneg %p1011
        $region70: #{advanced_gcn_forward.1} parent=59 // pred_check_branch
          %1014 = sbr.rel (%p1012) target = $region72
        $region71: #{advanced_gcn_forward.1} parent=59 // pred_region
          %v1015 = vld [vmem:[%s7] sm:$0xff]
          %v1016 = vld [vmem:[%s7 + $0x8] sm:$0xff]
          %v1017 = vld [vmem:[%s7 + $0x10] sm:$0xff]
          %v1018 = vld [vmem:[%s7 + $0x18] sm:$0xff]
          %v1019 = vld [vmem:[%s7 + $0x20] sm:$0xff]
          %v1020 = vld [vmem:[%s7 + $0x28] sm:$0xff]
          %v1021 = vld [vmem:[%s7 + $0x30] sm:$0xff]
          %v1022 = vld [vmem:[%s7 + $0x38] sm:$0xff]
          %v1023 = vld [vmem:[%s7 + $0x40] sm:$0xff]
          %v1024 = vld [vmem:[%s7 + $0x48] sm:$0xff]
          %v1025 = vld [vmem:[%s7 + $0x50] sm:$0xff]
          %v1026 = vld [vmem:[%s7 + $0x58] sm:$0xff]
          %v1027 = vld [vmem:[%s7 + $0x60] sm:$0xff]
          %v1028 = vld [vmem:[%s7 + $0x68] sm:$0xff]
          %v1029 = vld [vmem:[%s7 + $0x70] sm:$0xff]
          %v1030 = vld [vmem:[%s7 + $0x78] sm:$0xff]
          %1031 = vmatpush.msra.mxu0 %v1030
          %1032 = vmatpush.msra.mxu0 %v1029
          %1033 = vmatpush.msra.mxu0 %v1028
          %1034 = vmatpush.msra.mxu0 %v1027
          %1035 = vmatpush.msra.mxu0 %v1026
          %1036 = vmatpush.msra.mxu0 %v1025
          %1037 = vmatpush.msra.mxu0 %v1024
          %1038 = vmatpush.msra.mxu0 %v1023
          %1039 = vmatpush.msra.mxu0 %v1022
          %1040 = vmatpush.msra.mxu0 %v1021
          %1041 = vmatpush.msra.mxu0 %v1020
          %1042 = vmatpush.msra.mxu0 %v1019
          %1043 = vmatpush.msra.mxu0 %v1018
          %1044 = vmatpush.msra.mxu0 %v1017
          %1045 = vmatpush.msra.mxu0 %v1016
          %1046 = vmatpush.msra.mxu0 %v1015
          %1047 = vmatmul.f32.gmra.mxu0 %v983
          %v1048 = vpop.f32.mrf.mxu0
          %v1049 = vadd.f32 0.0, %v1048
          %1050 = vmatmul.f32.gmra.mxu0 %v984
          %v1051 = vpop.f32.mrf.mxu0
          %v1052 = vadd.f32 0.0, %v1051
          %1053 = vmatmul.f32.gmra.mxu0 %v985
          %v1054 = vpop.f32.mrf.mxu0
          %v1055 = vadd.f32 0.0, %v1054
          %1056 = vmatmul.f32.gmra.mxu0 %v986
          %v1057 = vpop.f32.mrf.mxu0
          %v1058 = vadd.f32 0.0, %v1057
          %1059 = vmatmul.f32.gmra.mxu0 %v987
          %v1060 = vpop.f32.mrf.mxu0
          %v1061 = vadd.f32 0.0, %v1060
          %1062 = vmatmul.f32.gmra.mxu0 %v988
          %v1063 = vpop.f32.mrf.mxu0
          %v1064 = vadd.f32 0.0, %v1063
          %1065 = vmatmul.f32.gmra.mxu0 %v989
          %v1066 = vpop.f32.mrf.mxu0
          %v1067 = vadd.f32 0.0, %v1066
          %1068 = vmatmul.f32.gmra.mxu0 %v990
          %v1069 = vpop.f32.mrf.mxu0
          %v1070 = vadd.f32 0.0, %v1069
          %1071 = vdwg.mxu0
          %v1072 = vld [vmem:[%s8] sm:$0xff]
          %v1073 = vld [vmem:[%s8 + $0x8] sm:$0xff]
          %v1074 = vld [vmem:[%s8 + $0x10] sm:$0xff]
          %v1075 = vld [vmem:[%s8 + $0x18] sm:$0xff]
          %v1076 = vld [vmem:[%s8 + $0x20] sm:$0xff]
          %v1077 = vld [vmem:[%s8 + $0x28] sm:$0xff]
          %v1078 = vld [vmem:[%s8 + $0x30] sm:$0xff]
          %v1079 = vld [vmem:[%s8 + $0x38] sm:$0xff]
          %1081 = vset.pattern.permute.xlu0 0
          %1082 = vperm.xlu0 %1081, %v1072
          %v1083 = vpop.permute.xlu0 %1082
          %1086 = vset.pattern.permute.xlu0 0
          %1087 = vperm.xlu0 %1086, %v1073
          %v1088 = vpop.permute.xlu0 %1087
          %1091 = vset.pattern.permute.xlu0 0
          %1092 = vperm.xlu0 %1091, %v1074
          %v1093 = vpop.permute.xlu0 %1092
          %1096 = vset.pattern.permute.xlu0 0
          %1097 = vperm.xlu0 %1096, %v1075
          %v1098 = vpop.permute.xlu0 %1097
          %1101 = vset.pattern.permute.xlu0 0
          %1102 = vperm.xlu0 %1101, %v1076
          %v1103 = vpop.permute.xlu0 %1102
          %1106 = vset.pattern.permute.xlu0 0
          %1107 = vperm.xlu0 %1106, %v1077
          %v1108 = vpop.permute.xlu0 %1107
          %1111 = vset.pattern.permute.xlu0 0
          %1112 = vperm.xlu0 %1111, %v1078
          %v1113 = vpop.permute.xlu0 %1112
          %1116 = vset.pattern.permute.xlu0 0
          %1117 = vperm.xlu0 %1116, %v1079
          %v1118 = vpop.permute.xlu0 %1117
          %v1120 = vmul.f32 %v1049, %v1083
          %v1121 = vmul.f32 %v1052, %v1088
          %v1122 = vmul.f32 %v1055, %v1093
          %v1123 = vmul.f32 %v1058, %v1098
          %v1124 = vmul.f32 %v1061, %v1103
          %v1125 = vmul.f32 %v1064, %v1108
          %v1126 = vmul.f32 %v1067, %v1113
          %v1127 = vmul.f32 %v1070, %v1118
          %vm1128 = vcmask 15360
          %v1129 = vsel %vm1128, %v1120, 0.0
          %v1130 = vsel %vm1128, %v1121, 0.0
          %v1131 = vadd.f32 %v1129, %v1130
          %v1132 = vsel %vm1128, %v1122, 0.0
          %v1133 = vadd.f32 %v1131, %v1132
          %v1134 = vsel %vm1128, %v1123, 0.0
          %v1135 = vadd.f32 %v1133, %v1134
          %v1136 = vsel %vm1128, %v1124, 0.0
          %v1137 = vadd.f32 %v1135, %v1136
          %v1138 = vsel %vm1128, %v1125, 0.0
          %v1139 = vadd.f32 %v1137, %v1138
          %v1140 = vsel %vm1128, %v1126, 0.0
          %v1141 = vadd.f32 %v1139, %v1140
          %v1142 = vsel %vm1128, %v1127, 0.0
          %v1143 = vadd.f32 %v1141, %v1142
          %v1144 = vrot.slane %v1143, 4
          %v1145 = vadd.f32 %v1143, %v1144
          %v1146 = vrot.slane %v1145, 2
          %v1147 = vadd.f32 %v1145, %v1146
          %v1148 = vrot.slane %v1147, 1
          %v1149 = vadd.f32 %v1147, %v1148
          %v1150 = vld [vmem:[#allocation3] sm:$0x1]
          %1152 = vset.pattern.permute.xlu0 0
          %1153 = vperm.xlu0 %1152, %v1150
          %v1154 = vpop.permute.xlu0 %1153
          %v1156 = vperm.slane %v1154, 0
          %v1157 = vadd.f32 %v1149, %v1156
          %vm1158 = vcmask 8192
          %1159 = vst.msk [vmem:[#allocation4] sm:$0x1] %vm1158, %v1157
        $region72: #{advanced_gcn_forward.1} parent=59 // pred_fallthru
          _
        // Predicated region
        $region73: #{advanced_gcn_forward.1} parent=59 // pred_check
          %p1160 = pneg %p247
        $region74: #{advanced_gcn_forward.1} parent=59 // pred_check_branch
          %1162 = sbr.rel (%p1160) target = $region76
        $region75: #{advanced_gcn_forward.1} parent=59 // pred_region
          %1164 = vsyncadd [#allocation5], 0
          %s1166 = sshll.u32 [#allocation4], 4
          %s1167 = int_to_ptr.vmem [resolvable:$true] %s1166
          %s1168 = sshll.u32 %s10, 4
          %s1169 = int_to_ptr.hbm [resolvable:$true] %s1168
          %1171 = dma.vmem_to_hbm [thread:$0]  %s1167, 16, %s1169, [#allocation5]
        $region76: #{advanced_gcn_forward.1} parent=59 // pred_fallthru
          _
        // Predicated region
        $region77: #{advanced_gcn_forward.1} parent=59 // pred_check
          %p1172 = pneg %p247
        $region78: #{advanced_gcn_forward.1} parent=59 // pred_check_branch
          %1174 = sbr.rel (%p1172) target = $region80
        $region79: #{advanced_gcn_forward.1} parent=59 // pred_region
          %1176 = dma.done [#allocation5], 16
        $region80: #{advanced_gcn_forward.1} parent=59 // pred_fallthru
          _
      $region60: #{advanced_gcn_forward.1} parent=5 // pred_fallthru
        _
      %p1177 = scmp.le.s32.totalorder 2, %s19
      // Predicated region
      $region81: #{advanced_gcn_forward.1} parent=5 // pred_check
        %p1178 = pneg %p1177
      $region82: #{advanced_gcn_forward.1} parent=5 // pred_check_branch
        %1180 = sbr.rel (%p1178) target = $region84
      $region83: #{advanced_gcn_forward.1} parent=5 // pred_region
        %s1181 = ssub.s32 %s19, 2
      $region84: #{advanced_gcn_forward.1} parent=5 // pred_fallthru
        _
    $region6: #{advanced_gcn_forward.1} parent=1 // loop_footer
      %s23 = sadd.s32 1, %s19
    $region7: #{advanced_gcn_forward.1} parent=1 // loop_footer_branch
      %18 = sbr.rel target = $region3
    $region8: #{advanced_gcn_forward.1} parent=1 // loop_exit
      _
    %1182 = vsyncpa [#allocation5], 1
    %s1183 = scalar_lea.sflag [#allocation5], 1
    %1184 = vsyncpa %s1183, 1

</llo_original>
